<compile_context>
chip_gen: v5e
topology: v5e:2x2
jax: 0.10.0
libtpu: 0.0.40
codegen_flags: <defaults>
</compile_context>

<pallas_src>
import functools
import math

import jax
import jax.numpy as jnp
from jax import lax
from jax.experimental import pallas as pl
from jax.experimental.pallas import tpu as pltpu


# ----------------------------------------------------------------------------
# Kernel: one streaming pass producing per-row [SSE, max(pred), max(gt)].
# ----------------------------------------------------------------------------
def _stats_kernel(pred_ref, gt_ref, sse_out, maxp_out, maxg_out,
                  sse_acc, maxp_acc, maxg_acc, *, tile_n, rem_last):
    # Grid = (row-blocks, col-chunks); k (chunk axis) is the fast/inner axis
    # and the accumulators live across it (output block index constant in k).
    k = pl.program_id(1)
    nk = pl.num_programs(1)

    @pl.when(k == 0)
    def _init():
        sse_acc[...] = jnp.zeros(sse_acc.shape, jnp.float32)
        maxp_acc[...] = jnp.full(maxp_acc.shape, -jnp.inf, jnp.float32)
        maxg_acc[...] = jnp.full(maxg_acc.shape, -jnp.inf, jnp.float32)

    p = pred_ref[...].astype(jnp.float32)
    g = gt_ref[...].astype(jnp.float32)

    def _accumulate(mask):
        d = p - g
        d2 = d * d
        pm, gm = p, g
        if mask is not None:
            d2 = jnp.where(mask, d2, 0.0)
            pm = jnp.where(mask, p, -jnp.inf)
            gm = jnp.where(mask, g, -jnp.inf)
        # Lane reductions: multi-vreg VALU tree + one intra-vreg XLU reduce.
        # The XLU slot is otherwise idle here, so this stays off the VALU
        # critical path; the hot loop is pure loads + a handful of VPU ops.
        sse_acc[...] += jnp.sum(d2, axis=1, keepdims=True)
        maxp_acc[...] = jnp.maximum(maxp_acc[...],
                                    jnp.max(pm, axis=1, keepdims=True))
        maxg_acc[...] = jnp.maximum(maxg_acc[...],
                                    jnp.max(gm, axis=1, keepdims=True))

    if rem_last == tile_n:
        # cols is a multiple of the lane tile: single lean hot path, no mask.
        _accumulate(None)
    else:
        # Ragged tail: only the last chunk pays for iota/compare/select.
        @pl.when(k < nk - 1)
        def _hot():
            _accumulate(None)

        @pl.when(k == nk - 1)
        def _tail():
            col = lax.broadcasted_iota(jnp.int32, p.shape, 1)
            _accumulate(col < rem_last)

    @pl.when(k == nk - 1)
    def _finalize():
        sse_out[...] = sse_acc[...]
        maxp_out[...] = maxp_acc[...]
        maxg_out[...] = maxg_acc[...]


# ----------------------------------------------------------------------------
# Tiling helpers.
# ----------------------------------------------------------------------------
def _round_up(x, m):
    return (x + m - 1) // m * m


def _sublane_pack(itemsize):
    # Native sublane packing: 8 for 4-byte, 16 for 2-byte, 32 for 1-byte types.
    return max(8, 32 // max(1, itemsize))


def _vmem_budget():
    """(input-tile budget, vmem_limit_bytes) picked per TPU generation."""
    cap = 64 * 1024 * 1024
    try:
        cap = int(pltpu.get_tpu_info().vmem_capacity_bytes)
    except Exception:
        pass  # conservative default below works on every generation
    if cap >= 100 * 1024 * 1024:
        # v5e / v6e: 128 MiB physical VMEM.
        return 48 * 1024 * 1024, 96 * 1024 * 1024
    # v7x: 64 MiB physical per TensorCore -- leave Mosaic scratch headroom.
    return 24 * 1024 * 1024, 48 * 1024 * 1024


def _choose_fold(B, N, pack):
    """Smallest fold F (N % F == 0) so that rows = B*F fills the sublane
    packing and, when possible, leaves >= 2 row blocks (megacore on v7x)."""
    if B % pack == 0 and B >= 2 * pack:
        return 1
    for f in (2, 4, 8, 16, 32, 64):
        rows = B * f
        if N % f == 0 and rows % pack == 0 and rows >= 2 * pack and N // f >= 128:
            return f
    for f in (2, 4, 8, 16, 32, 64):
        rows = B * f
        if N % f == 0 and rows % pack == 0 and N // f >= 128:
            return f
    return 1


def _choose_tiles(rows, cols, isz_sum, pack, budget):
    """Pick (tb, tn): 2 inputs x 2 pipeline buffers of (tb, tn) must fit
    `budget`; tn is a multiple of 128."""
    cols_p = _round_up(cols, 128)

    if rows % pack != 0:
        # Degenerate small/odd batch that could not be folded.
        tb = rows
        per_col = 2 * _round_up(tb, 8) * isz_sum
        tn = min(cols_p, max(128, (budget // per_col) // 128 * 128))
        return tb, tn

    # Row tile: start at the dtype packing; grow while it divides rows, keeps
    # >= 2 row blocks when possible, and a full-width lane tile still fits.
    tb_cap = rows if rows < 2 * pack else rows // 2
    max_rows_budget = max(pack, (budget // (2 * cols_p * isz_sum)) // pack * pack)
    tb = pack
    while (tb * 2 <= tb_cap and rows % (tb * 2) == 0
           and tb * 2 <= max_rows_budget):
        tb *= 2
    per_col = 2 * tb * isz_sum
    tn = min(cols_p, max(128, (budget // per_col) // 128 * 128))
    return tb, tn


# ----------------------------------------------------------------------------
# Wrapper: PSNR.forward (valid=None path).
# ----------------------------------------------------------------------------
def _as_nchw_shape(x):
    if x.shape[-1] == 3:
        return (x.shape[0], x.shape[3], x.shape[1], x.shape[2])
    return x.shape


def psnr_pallas(pred, gt, *, boundary_ignore=None, max_value=1.0):
    if pred.ndim == 3:
        pred = pred[None]
    if gt.ndim == 3:
        gt = gt[None]

    pred_is_nhwc = pred.shape[-1] == 3
    gt_is_nhwc = gt.shape[-1] == 3
    # The reference permutes NHWC->NCHW in processed().  Per-image MSE is
    # permutation invariant, so we only materialize the permute when spatial
    # axes matter (boundary_ignore) or the two inputs would otherwise pair
    # elements inconsistently.
    need_permute = (boundary_ignore is not None) or (pred_is_nhwc != gt_is_nhwc)
    if need_permute:
        if pred_is_nhwc:
            pred = jnp.transpose(pred, (0, 3, 1, 2))
        if gt_is_nhwc:
            gt = jnp.transpose(gt, (0, 3, 1, 2))
        shape_p, shape_g = pred.shape, gt.shape
    else:
        shape_p, shape_g = _as_nchw_shape(pred), _as_nchw_shape(gt)
    assert pred.ndim == 4 and shape_p == shape_g, f"{shape_p}, {shape_g}"

    # The reference decides the /255 rescale on the *uncropped* tensors; on the
    # (non-default) boundary_ignore path compute those maxes here, since the
    # crop below materializes a copy anyway.
    pre_max_p = pre_max_g = None
    if boundary_ignore is not None:
        if max_value == 1:
            pre_max_p = jnp.max(pred).astype(jnp.float32)
            pre_max_g = jnp.max(gt).astype(jnp.float32)
        bi = boundary_ignore
        # TODO(synk): read the crop window straight from the original layout
        # via the BlockSpec index_map instead of slice+reshape (this path
        # materializes a cropped copy of both inputs in HBM).
        pred = pred[..., bi:-bi, bi:-bi]
        gt = gt[..., bi:-bi, bi:-bi]

    B = pred.shape[0]
    n_elems = int(pred.shape[1] * pred.shape[2] * pred.shape[3])

    # Flatten per image; native dtype goes straight into the kernel (cast
    # per-tile in VMEM), no wrapper-side f32 copy in HBM.
    pred2 = pred.reshape(B, n_elems)
    gt2 = gt.reshape(B, n_elems)

    isz_p = jnp.dtype(pred2.dtype).itemsize
    isz_g = jnp.dtype(gt2.dtype).itemsize
    pack = max(_sublane_pack(isz_p), _sublane_pack(isz_g))

    # Fold part of N into the row axis: full sublanes for small batches and a
    # "parallel" row axis with >= 2 blocks (both TensorCores on v7x).
    fold = _choose_fold(B, n_elems, pack)
    rows, cols = B * fold, n_elems // fold
    pred2 = pred2.reshape(rows, cols)   # row-major split: free, no HBM copy
    gt2 = gt2.reshape(rows, cols)

    tile_budget, vmem_limit = _vmem_budget()
    tb, tn = _choose_tiles(rows, cols, isz_p + isz_g, pack, tile_budget)
    nb = rows // tb
    nk = int(pl.cdiv(cols, tn))
    rem_last = cols - (nk - 1) * tn

    kernel = functools.partial(_stats_kernel, tile_n=tn, rem_last=rem_last)

    sse_rows, maxp_rows, maxg_rows = pl.pallas_call(
        kernel,
        out_shape=(
            jax.ShapeDtypeStruct((rows, 1), jnp.float32),
            jax.ShapeDtypeStruct((rows, 1), jnp.float32),
            jax.ShapeDtypeStruct((rows, 1), jnp.float32),
        ),
        grid_spec=pltpu.PrefetchScalarGridSpec(
            num_scalar_prefetch=0,
            grid=(nb, nk),
            in_specs=[
                pl.BlockSpec((tb, tn), lambda b, k: (b, k)),   # pred
                pl.BlockSpec((tb, tn), lambda b, k: (b, k)),   # gt
            ],
            out_specs=(
                pl.BlockSpec((tb, 1), lambda b, k: (b, 0)),    # per-row SSE
                pl.BlockSpec((tb, 1), lambda b, k: (b, 0)),    # per-row max(p)
                pl.BlockSpec((tb, 1), lambda b, k: (b, 0)),    # per-row max(g)
            ),
            scratch_shapes=[
                pltpu.VMEM((tb, 1), jnp.float32),
                pltpu.VMEM((tb, 1), jnp.float32),
                pltpu.VMEM((tb, 1), jnp.float32),
            ],
        ),
        compiler_params=pltpu.CompilerParams(
            dimension_semantics=("parallel", "arbitrary"),
            vmem_limit_bytes=vmem_limit,
        ),
    )(pred2, gt2)

    # Per-image unscaled SSE (sum the fold sub-rows).
    sse_img = jnp.sum(sse_rows.reshape(B, fold), axis=1)          # (B,)

    if max_value == 1:
        max_p = pre_max_p if pre_max_p is not None else jnp.max(maxp_rows)
        max_g = pre_max_g if pre_max_g is not None else jnp.max(maxg_rows)
        s_p = jnp.where(max_p > 2, 1.0 / 255.0, 1.0).astype(jnp.float32)
        s_g = jnp.where(max_g > 2, 1.0 / 255.0, 1.0).astype(jnp.float32)

        def _same_scale(_):
            # Common case (both scaled or both unscaled): exact rescale of the
            # kernel's unscaled SSE -- no second pass over the data.
            return (s_p * s_p) * sse_img

        def _mixed_scale(_):
            # Rare case: exactly one input is in [0,255].  Recompute the
            # scaled SSE in plain JAX; only executed when actually taken.
            d = pred2.astype(jnp.float32) * s_p - gt2.astype(jnp.float32) * s_g
            return jnp.sum((d * d).reshape(B, -1), axis=1)

        sse_img = lax.cond(s_p == s_g, _same_scale, _mixed_scale, 0)

    mse = sse_img / jnp.float32(n_elems)
    # mse == 0 -> log10(0) = -inf -> psnr = +inf, same as the reference.
    psnr_per_image = 20.0 * math.log10(max_value) - 10.0 * jnp.log10(mse)
    return jnp.mean(psnr_per_image)


# ----------------------------------------------------------------------------
# Pure-JAX reference (PyTorch forward, valid=None path).
# ----------------------------------------------------------------------------
def _psnr_ref(pred, gt, max_value=1.0):
    mse = jnp.mean((pred - gt) ** 2, axis=(1, 2, 3))              # per-image MSE
    psnr = 20.0 * math.log10(max_value) - 10.0 * jnp.log10(mse)   # per-image PSNR
    return jnp.mean(psnr)


if __name__ == "__main__":
    key = jax.random.PRNGKey(0)
    k1, k2 = jax.random.split(key)
    # NCHW inputs in [0, 1], like normalized images.
    pred = jax.random.uniform(k1, (2, 4, 16, 16), dtype=jnp.float32)
    gt = jax.random.uniform(k2, (2, 4, 16, 16), dtype=jnp.float32)

    out = psnr_pallas(pred, gt)
    out = jax.block_until_ready(out)

    ref = _psnr_ref(pred, gt)
    assert jnp.allclose(out, ref, rtol=1e-4, atol=1e-4), (out, ref)

    print("KERNEL_OK")
</pallas_src>

<mosaic_0001>
module attributes {stable_mosaic.version = 11 : i64} {
  func.func @_stats_kernel(%arg0: i32, %arg1: i32, %arg2: memref<8x128xf32, #tpu.memory_space<vmem>>, %arg3: memref<8x128xf32, #tpu.memory_space<vmem>>, %arg4: memref<8x1xf32, #tpu.memory_space<vmem>>, %arg5: memref<8x1xf32, #tpu.memory_space<vmem>>, %arg6: memref<8x1xf32, #tpu.memory_space<vmem>>, %arg7: memref<8x1xf32, #tpu.memory_space<vmem>>, %arg8: memref<8x1xf32, #tpu.memory_space<vmem>>, %arg9: memref<8x1xf32, #tpu.memory_space<vmem>>) attributes {dimension_semantics = [#tpu.dimension_semantics<parallel>, #tpu.dimension_semantics<arbitrary>], iteration_bounds = array<i64: 2, 1>, scalar_prefetch = 0 : i64, scratch_operands = 3 : i64, tpu.core_type = #tpu.core_type<tc>, window_params = [{transform_indices = @transform_0, window_bounds = array<i64: 8, 128>}, {transform_indices = @transform_1, window_bounds = array<i64: 8, 128>}, {transform_indices = @transform_2, window_bounds = array<i64: 8, 1>}, {transform_indices = @transform_3, window_bounds = array<i64: 8, 1>}, {transform_indices = @transform_4, window_bounds = array<i64: 8, 1>}]} {
    %c0_i32 = arith.constant 0 : i32
    %0 = arith.cmpi eq, %arg1, %c0_i32 : i32
    %1 = arith.extui %0 : i1 to i32
    %c0_i32_0 = arith.constant 0 : i32
    %2 = arith.cmpi ne, %1, %c0_i32_0 : i32
    scf.if %2 {
      %cst_20 = arith.constant 0.000000e+00 : f32
      %25 = vector.broadcast %cst_20 : f32 to vector<8x1xf32>
      %c0_21 = arith.constant 0 : index
      %c0_22 = arith.constant 0 : index
      %26 = vector.load %arg7[%c0_21, %c0_22] : memref<8x1xf32, #tpu.memory_space<vmem>>, vector<8x1xf32>
      tpu.vector_store %arg7[%c0_21, %c0_22], %25 {strides = array<i32>} : memref<8x1xf32, #tpu.memory_space<vmem>>, vector<8x1xf32>,
      %cst_23 = arith.constant 0xFF800000 : f32
      %27 = vector.broadcast %cst_23 : f32 to vector<8x1xf32>
      %c0_24 = arith.constant 0 : index
      %c0_25 = arith.constant 0 : index
      %28 = vector.load %arg8[%c0_24, %c0_25] : memref<8x1xf32, #tpu.memory_space<vmem>>, vector<8x1xf32>
      tpu.vector_store %arg8[%c0_24, %c0_25], %27 {strides = array<i32>} : memref<8x1xf32, #tpu.memory_space<vmem>>, vector<8x1xf32>,
      %cst_26 = arith.constant 0xFF800000 : f32
      %29 = vector.broadcast %cst_26 : f32 to vector<8x1xf32>
      %c0_27 = arith.constant 0 : index
      %c0_28 = arith.constant 0 : index
      %30 = vector.load %arg9[%c0_27, %c0_28] : memref<8x1xf32, #tpu.memory_space<vmem>>, vector<8x1xf32>
      tpu.vector_store %arg9[%c0_27, %c0_28], %29 {strides = array<i32>} : memref<8x1xf32, #tpu.memory_space<vmem>>, vector<8x1xf32>,
    } else {
    }
    %c0 = arith.constant 0 : index
    %c0_1 = arith.constant 0 : index
    %3 = vector.load %arg2[%c0, %c0_1] : memref<8x128xf32, #tpu.memory_space<vmem>>, vector<8x128xf32>
    %c0_2 = arith.constant 0 : index
    %c0_3 = arith.constant 0 : index
    %4 = vector.load %arg3[%c0_2, %c0_3] : memref<8x128xf32, #tpu.memory_space<vmem>>, vector<8x128xf32>
    %5 = arith.subf %3, %4 : vector<8x128xf32>
    %6 = arith.mulf %5, %5 : vector<8x128xf32>
    %c0_4 = arith.constant 0 : index
    %c0_5 = arith.constant 0 : index
    %7 = vector.load %arg7[%c0_4, %c0_5] : memref<8x1xf32, #tpu.memory_space<vmem>>, vector<8x1xf32>
    %cst = arith.constant dense<0.000000e+00> : vector<8xf32>
    %8 = vector.multi_reduction <add>, %6, %cst [1] : vector<8x128xf32> to vector<8xf32>
    %9 = vector.shape_cast %8 : vector<8xf32> to vector<8x1xf32>
    %10 = arith.addf %7, %9 : vector<8x1xf32>
    %c0_6 = arith.constant 0 : index
    %c0_7 = arith.constant 0 : index
    %11 = vector.load %arg7[%c0_6, %c0_7] : memref<8x1xf32, #tpu.memory_space<vmem>>, vector<8x1xf32>
    tpu.vector_store %arg7[%c0_6, %c0_7], %10 {strides = array<i32>} : memref<8x1xf32, #tpu.memory_space<vmem>>, vector<8x1xf32>,
    %c0_8 = arith.constant 0 : index
    %c0_9 = arith.constant 0 : index
    %12 = vector.load %arg8[%c0_8, %c0_9] : memref<8x1xf32, #tpu.memory_space<vmem>>, vector<8x1xf32>
    %cst_10 = arith.constant dense<0xFF800000> : vector<8xf32>
    %13 = vector.multi_reduction <maximumf>, %3, %cst_10 [1] : vector<8x128xf32> to vector<8xf32>
    %14 = vector.shape_cast %13 : vector<8xf32> to vector<8x1xf32>
    %15 = arith.maximumf %12, %14 : vector<8x1xf32>
    %c0_11 = arith.constant 0 : index
    %c0_12 = arith.constant 0 : index
    %16 = vector.load %arg8[%c0_11, %c0_12] : memref<8x1xf32, #tpu.memory_space<vmem>>, vector<8x1xf32>
    tpu.vector_store %arg8[%c0_11, %c0_12], %15 {strides = array<i32>} : memref<8x1xf32, #tpu.memory_space<vmem>>, vector<8x1xf32>,
    %c0_13 = arith.constant 0 : index
    %c0_14 = arith.constant 0 : index
    %17 = vector.load %arg9[%c0_13, %c0_14] : memref<8x1xf32, #tpu.memory_space<vmem>>, vector<8x1xf32>
    %cst_15 = arith.constant dense<0xFF800000> : vector<8xf32>
    %18 = vector.multi_reduction <maximumf>, %4, %cst_15 [1] : vector<8x128xf32> to vector<8xf32>
    %19 = vector.shape_cast %18 : vector<8xf32> to vector<8x1xf32>
    %20 = arith.maximumf %17, %19 : vector<8x1xf32>
    %c0_16 = arith.constant 0 : index
    %c0_17 = arith.constant 0 : index
    %21 = vector.load %arg9[%c0_16, %c0_17] : memref<8x1xf32, #tpu.memory_space<vmem>>, vector<8x1xf32>
    tpu.vector_store %arg9[%c0_16, %c0_17], %20 {strides = array<i32>} : memref<8x1xf32, #tpu.memory_space<vmem>>, vector<8x1xf32>,
    %c0_i32_18 = arith.constant 0 : i32
    %22 = arith.cmpi eq, %arg1, %c0_i32_18 : i32
    %23 = arith.extui %22 : i1 to i32
    %c0_i32_19 = arith.constant 0 : i32
    %24 = arith.cmpi ne, %23, %c0_i32_19 : i32
    scf.if %24 {
      %c0_20 = arith.constant 0 : index
      %c0_21 = arith.constant 0 : index
      %25 = vector.load %arg7[%c0_20, %c0_21] : memref<8x1xf32, #tpu.memory_space<vmem>>, vector<8x1xf32>
      %c0_22 = arith.constant 0 : index
      %c0_23 = arith.constant 0 : index
      %26 = vector.load %arg4[%c0_22, %c0_23] : memref<8x1xf32, #tpu.memory_space<vmem>>, vector<8x1xf32>
      tpu.vector_store %arg4[%c0_22, %c0_23], %25 {strides = array<i32>} : memref<8x1xf32, #tpu.memory_space<vmem>>, vector<8x1xf32>,
      %c0_24 = arith.constant 0 : index
      %c0_25 = arith.constant 0 : index
      %27 = vector.load %arg8[%c0_24, %c0_25] : memref<8x1xf32, #tpu.memory_space<vmem>>, vector<8x1xf32>
      %c0_26 = arith.constant 0 : index
      %c0_27 = arith.constant 0 : index
      %28 = vector.load %arg5[%c0_26, %c0_27] : memref<8x1xf32, #tpu.memory_space<vmem>>, vector<8x1xf32>
      tpu.vector_store %arg5[%c0_26, %c0_27], %27 {strides = array<i32>} : memref<8x1xf32, #tpu.memory_space<vmem>>, vector<8x1xf32>,
      %c0_28 = arith.constant 0 : index
      %c0_29 = arith.constant 0 : index
      %29 = vector.load %arg9[%c0_28, %c0_29] : memref<8x1xf32, #tpu.memory_space<vmem>>, vector<8x1xf32>
      %c0_30 = arith.constant 0 : index
      %c0_31 = arith.constant 0 : index
      %30 = vector.load %arg6[%c0_30, %c0_31] : memref<8x1xf32, #tpu.memory_space<vmem>>, vector<8x1xf32>
      tpu.vector_store %arg6[%c0_30, %c0_31], %29 {strides = array<i32>} : memref<8x1xf32, #tpu.memory_space<vmem>>, vector<8x1xf32>,
    } else {
    }
    return
  }
  func.func @transform_0(%arg0: i32, %arg1: i32) -> (i32, i32) {
    %c0_i32 = arith.constant 0 : i32
    return %arg0, %arg1 : i32, i32
  }
  func.func @transform_1(%arg0: i32, %arg1: i32) -> (i32, i32) {
    %c0_i32 = arith.constant 0 : i32
    return %arg0, %arg1 : i32, i32
  }
  func.func @transform_2(%arg0: i32, %arg1: i32) -> (i32, i32) {
    %c0_i32 = arith.constant 0 : i32
    %c0_i32_0 = arith.constant 0 : i32
    return %arg0, %c0_i32 : i32, i32
  }
  func.func @transform_3(%arg0: i32, %arg1: i32) -> (i32, i32) {
    %c0_i32 = arith.constant 0 : i32
    %c0_i32_0 = arith.constant 0 : i32
    return %arg0, %c0_i32 : i32, i32
  }
  func.func @transform_4(%arg0: i32, %arg1: i32) -> (i32, i32) {
    %c0_i32 = arith.constant 0 : i32
    %c0_i32_0 = arith.constant 0 : i32
    return %arg0, %c0_i32 : i32, i32
  }
}

</mosaic_0001>

<llo_original>
// kernel: tpu_custom_call.1
$region0: #{tpu_custom_call.1}
  #allocation0 [shape = 'u32[]', space=smem, size = 0x4, offset = 0x4, fixed_abs, tag = 'smem constant byte address 0x4 - core index']
  #allocation1 [shape = 'u32[72,128]{1,0:T(1,128)}', space=vmem, size = 0x9000, scoped, tag = 'internal scratch']
  #allocation2 [shape = 'f32[8,1]{1,0:T(8,128)}', space=vmem, size = 0x1000, scoped, tag = 'scratch operand']
  #allocation3 [shape = 'f32[8,1]{1,0:T(8,128)}', space=vmem, size = 0x1000, scoped, tag = 'scratch operand']
  #allocation4 [shape = 'f32[8,1]{1,0:T(8,128)}', space=vmem, size = 0x1000, scoped, tag = 'scratch operand']
  %s0 = inlined_call_operand.hbm [shape: f32[16,128], index: 0, kind: input, shape index: {}]
  %s1 = inlined_call_operand.hbm [shape: f32[16,128], index: 1, kind: input, shape index: {}]
  %s2 = inlined_call_operand.vmem [shape: f32[16,1], index: 2, kind: output, shape index: {0}]
  %s3 = inlined_call_operand.vmem [shape: f32[16,1], index: 3, kind: output, shape index: {1}]
  %s4 = inlined_call_operand.vmem [shape: f32[16,1], index: 4, kind: output, shape index: {2}]
  %5 = xla_tuple %s2, %s3, %s4
  %s6 = sld [smem:[#allocation0]]
  $region73: #{tpu_custom_call.1} parent=0
    _
  %s8 = ssub.s32 1, %s6
  %s9 = scalar_select 0, %s8, %s6
  $region1: #{tpu_custom_call.1} parent=0
    #allocation5 [shape = 'u8[8192]{0}', space=vmem, size = 0x2000, scoped, tag = 'input window, operand 0']
    #allocation6 [shape = 's32[2]{0}', space=sflag, size = 0x8, scoped, tag = 'scoped memory for tpu_custom_call.1']
    #allocation7 [shape = 'u8[8192]{0}', space=vmem, size = 0x2000, scoped, tag = 'input window, operand 1']
    #allocation8 [shape = 's32[2]{0}', space=sflag, size = 0x8, scoped, tag = 'scoped memory for tpu_custom_call.1']
    %10 = vsyncpa [#allocation6], 0
    %s11 = scalar_lea.sflag [#allocation6], 1
    %12 = vsyncpa %s11, 0
    %13 = vsyncpa [#allocation8], 0
    %s14 = scalar_lea.sflag [#allocation8], 1
    %15 = vsyncpa %s14, 0
    loop: start=0, step=1, limit=4
    $region2: #{tpu_custom_call.1} parent=1 // loop_pre_header
      _
    $region3: #{tpu_custom_call.1} parent=1 // loop_header
      %s17 = sphi 0, %s21
      %p18 = scmp.ge.s32.totalorder %s17, 4
      %s24 = sphi 0, %s36
      %s25 = sphi 0, %s32
      %s26 = sphi 0, %s24
      %s27 = sphi 0, %s25
      %s28 = sphi 0, %s26
      %s29 = sphi 0, %s27
      %s41 = sphi 0, %s43
      %s44 = sphi 0, %s41
      %s45 = sphi 0, %s44
      %s61 = sphi 0, %s45
      %s69 = sphi 0, %s71
      %s72 = sphi 0, %s69
      %s73 = sphi 0, %s72
      %s89 = sphi 0, %s73
      %s95 = sphi 0, %s97
      %s98 = sphi 0, %s95
      %s99 = sphi 0, %s98
      %s115 = sphi 0, %s99
      %s121 = sphi 0, %s123
      %s124 = sphi 0, %s121
      %s125 = sphi 0, %s124
      %s141 = sphi 0, %s125
      %s147 = sphi 0, %s149
      %s150 = sphi 0, %s147
      %s151 = sphi 0, %s150
      %s167 = sphi 0, %s151
    $region4: #{tpu_custom_call.1} parent=1 // loop_header_branch
      %20 = sbr.rel (%p18) target = $region8
    $region5: #{tpu_custom_call.1} parent=1 // loop_body
      %s22 = ssub.s32 %s17, 1
      %s23 = ssub.s32 %s17, 2
      %s30 = sadd.s32 1, %s25
      %p31 = scmp.ge.s32.totalorder %s30, 1
      %s32 = scalar_select %p31, 0, %s30
      %s33 = sadd.s32 1, %s24
      %s34 = scalar_select %p31, %s33, %s24
      %p35 = scmp.ge.s32.totalorder %s34, 2
      %s36 = scalar_select %p35, 0, %s34
      %s37 = ssub.s32 %s24, %s36
      %s38 = ssub.s32 %s25, %s32
      %s39 = sor.u32 %s37, %s38
      %p40 = scmp.eq.s32.totalorder %s39, 0
      %s42 = sadd.s32 %s41, 1
      %s43 = scalar_select %p40, %s41, %s42
      %p46 = pneg %p40
      %p47 = scmp.eq.s32.totalorder %s17, 1
      %p48 = por %p46, %p47
      %p49 = scmp.ne.s32.totalorder %s41, %s44
      %p50 = scmp.eq.s32.totalorder %s17, 0
      %p51 = por %p49, %p50
      %p52 = scmp.ne.s32.totalorder %s41, %s44
      %p53 = scmp.eq.s32.totalorder %s22, 1
      %p54 = por %p52, %p53
      %p55 = scmp.ne.s32.totalorder %s44, %s45
      %p56 = scmp.eq.s32.totalorder %s22, 0
      %p57 = por %p55, %p56
      %p58 = scmp.ne.s32.totalorder %s44, %s45
      %p59 = scmp.eq.s32.totalorder %s23, 1
      %p60 = por %p58, %p59
      %p62 = scmp.ne.s32.totalorder %s45, %s61
      %p63 = scmp.eq.s32.totalorder %s23, 0
      %p64 = por %p62, %p63
      %s65 = ssub.s32 %s24, %s36
      %s66 = ssub.s32 %s25, %s32
      %s67 = sor.u32 %s65, %s66
      %p68 = scmp.eq.s32.totalorder %s67, 0
      %s70 = sadd.s32 %s69, 1
      %s71 = scalar_select %p68, %s69, %s70
      %p74 = pneg %p68
      %p75 = scmp.eq.s32.totalorder %s17, 1
      %p76 = por %p74, %p75
      %p77 = scmp.ne.s32.totalorder %s69, %s72
      %p78 = scmp.eq.s32.totalorder %s17, 0
      %p79 = por %p77, %p78
      %p80 = scmp.ne.s32.totalorder %s69, %s72
      %p81 = scmp.eq.s32.totalorder %s22, 1
      %p82 = por %p80, %p81
      %p83 = scmp.ne.s32.totalorder %s72, %s73
      %p84 = scmp.eq.s32.totalorder %s22, 0
      %p85 = por %p83, %p84
      %p86 = scmp.ne.s32.totalorder %s72, %s73
      %p87 = scmp.eq.s32.totalorder %s23, 1
      %p88 = por %p86, %p87
      %p90 = scmp.ne.s32.totalorder %s73, %s89
      %p91 = scmp.eq.s32.totalorder %s23, 0
      %p92 = por %p90, %p91
      %s93 = ssub.s32 %s24, %s36
      %p94 = scmp.eq.s32.totalorder %s93, 0
      %s96 = sadd.s32 %s95, 1
      %s97 = scalar_select %p94, %s95, %s96
      %p100 = pneg %p94
      %p101 = scmp.eq.s32.totalorder %s17, 1
      %p102 = por %p100, %p101
      %p103 = scmp.ne.s32.totalorder %s95, %s98
      %p104 = scmp.eq.s32.totalorder %s17, 0
      %p105 = por %p103, %p104
      %p106 = scmp.ne.s32.totalorder %s95, %s98
      %p107 = scmp.eq.s32.totalorder %s22, 1
      %p108 = por %p106, %p107
      %p109 = scmp.ne.s32.totalorder %s98, %s99
      %p110 = scmp.eq.s32.totalorder %s22, 0
      %p111 = por %p109, %p110
      %p112 = scmp.ne.s32.totalorder %s98, %s99
      %p113 = scmp.eq.s32.totalorder %s23, 1
      %p114 = por %p112, %p113
      %p116 = scmp.ne.s32.totalorder %s99, %s115
      %p117 = scmp.eq.s32.totalorder %s23, 0
      %p118 = por %p116, %p117
      %s119 = ssub.s32 %s24, %s36
      %p120 = scmp.eq.s32.totalorder %s119, 0
      %s122 = sadd.s32 %s121, 1
      %s123 = scalar_select %p120, %s121, %s122
      %p126 = pneg %p120
      %p127 = scmp.eq.s32.totalorder %s17, 1
      %p128 = por %p126, %p127
      %p129 = scmp.ne.s32.totalorder %s121, %s124
      %p130 = scmp.eq.s32.totalorder %s17, 0
      %p131 = por %p129, %p130
      %p132 = scmp.ne.s32.totalorder %s121, %s124
      %p133 = scmp.eq.s32.totalorder %s22, 1
      %p134 = por %p132, %p133
      %p135 = scmp.ne.s32.totalorder %s124, %s125
      %p136 = scmp.eq.s32.totalorder %s22, 0
      %p137 = por %p135, %p136
      %p138 = scmp.ne.s32.totalorder %s124, %s125
      %p139 = scmp.eq.s32.totalorder %s23, 1
      %p140 = por %p138, %p139
      %p142 = scmp.ne.s32.totalorder %s125, %s141
      %p143 = scmp.eq.s32.totalorder %s23, 0
      %p144 = por %p142, %p143
      %s145 = ssub.s32 %s24, %s36
      %p146 = scmp.eq.s32.totalorder %s145, 0
      %s148 = sadd.s32 %s147, 1
      %s149 = scalar_select %p146, %s147, %s148
      %p152 = pneg %p146
      %p153 = scmp.eq.s32.totalorder %s17, 1
      %p154 = por %p152, %p153
      %p155 = scmp.ne.s32.totalorder %s147, %s150
      %p156 = scmp.eq.s32.totalorder %s17, 0
      %p157 = por %p155, %p156
      %p158 = scmp.ne.s32.totalorder %s147, %s150
      %p159 = scmp.eq.s32.totalorder %s22, 1
      %p160 = por %p158, %p159
      %p161 = scmp.ne.s32.totalorder %s150, %s151
      %p162 = scmp.eq.s32.totalorder %s22, 0
      %p163 = por %p161, %p162
      %p164 = scmp.ne.s32.totalorder %s150, %s151
      %p165 = scmp.eq.s32.totalorder %s23, 1
      %p166 = por %p164, %p165
      %p168 = scmp.ne.s32.totalorder %s151, %s167
      %p169 = scmp.eq.s32.totalorder %s23, 0
      %p170 = por %p168, %p169
      %p171 = scmp.le.s32.totalorder 1, %s17
      %p172 = scmp.lt.s32.totalorder %s17, 3
      %p173 = pnand %p171, %p172
      %p174 = pneg %p173
      // Predicated region
      $region9: #{tpu_custom_call.1} parent=5 // pred_check
        _
      $region10: #{tpu_custom_call.1} parent=5 // pred_check_branch
        %176 = sbr.rel (%p173) target = $region12
      $region11: #{tpu_custom_call.1} parent=5 // pred_region
        %s177 = ssub.s32 %s17, 1
      $region12: #{tpu_custom_call.1} parent=5 // pred_fallthru
        _
      %p178 = scmp.lt.s32.totalorder %s17, 2
      // Predicated region
      $region13: #{tpu_custom_call.1} parent=5 // pred_check
        %p179 = pneg %p178
      $region14: #{tpu_custom_call.1} parent=5 // pred_check_branch
        %181 = sbr.rel (%p179) target = $region16
      $region15: #{tpu_custom_call.1} parent=5 // pred_region
        // Predicated region
        $region17: #{tpu_custom_call.1} parent=15 // pred_check
          %p182 = pneg %p51
        $region18: #{tpu_custom_call.1} parent=15 // pred_check_branch
          %184 = sbr.rel (%p182) target = $region20
        $region19: #{tpu_custom_call.1} parent=15 // pred_region
          %s185 = sand.u32 %s41, 1
          %s186 = scalar_lea.sflag [#allocation6], %s185
          %s187 = sand.u32 %s41, 1
          %s188 = smul.addr %s187, 8
          %s189 = scalar_lea.vmem [#allocation5], %s188
          %191 = vsyncadd %s186, 0
          %s192 = sadd.s32 %s25, %s24
          %s193 = smul.addr %s192, 8
          %s194 = scalar_lea.hbm %s0, %s193
          %s196 = sshll.u32 %s194, 4
          %s197 = int_to_ptr.hbm [resolvable:$true] %s196
          %s198 = sshll.u32 %s189, 4
          %s199 = int_to_ptr.vmem [resolvable:$true] %s198
          %201 = dma.hbm_to_vmem [thread:$0]  %s197, 128, %s199, %s186
        $region20: #{tpu_custom_call.1} parent=15 // pred_fallthru
          _
        // Predicated region
        $region21: #{tpu_custom_call.1} parent=15 // pred_check
          %p202 = pneg %p79
        $region22: #{tpu_custom_call.1} parent=15 // pred_check_branch
          %204 = sbr.rel (%p202) target = $region24
        $region23: #{tpu_custom_call.1} parent=15 // pred_region
          %s205 = sand.u32 %s69, 1
          %s206 = scalar_lea.sflag [#allocation8], %s205
          %s207 = sand.u32 %s69, 1
          %s208 = smul.addr %s207, 8
          %s209 = scalar_lea.vmem [#allocation7], %s208
          %211 = vsyncadd %s206, 0
          %s212 = sadd.s32 %s25, %s24
          %s213 = smul.addr %s212, 8
          %s214 = scalar_lea.hbm %s1, %s213
          %s216 = sshll.u32 %s214, 4
          %s217 = int_to_ptr.hbm [resolvable:$true] %s216
          %s218 = sshll.u32 %s209, 4
          %s219 = int_to_ptr.vmem [resolvable:$true] %s218
          %221 = dma.hbm_to_vmem [thread:$0]  %s217, 128, %s219, %s206
        $region24: #{tpu_custom_call.1} parent=15 // pred_fallthru
          _
      $region16: #{tpu_custom_call.1} parent=5 // pred_fallthru
        _
      %p222 = scmp.le.s32.totalorder 1, %s17
      %p223 = scmp.lt.s32.totalorder %s17, 3
      %p224 = pnand %p222, %p223
      %p225 = pneg %p224
      // Predicated region
      $region25: #{tpu_custom_call.1} parent=5 // pred_check
        _
      $region26: #{tpu_custom_call.1} parent=5 // pred_check_branch
        %227 = sbr.rel (%p224) target = $region28
      $region27: #{tpu_custom_call.1} parent=5 // pred_region
        %s228 = ssub.s32 %s17, 1
        %s229 = sand.u32 %s44, 1
        %s230 = scalar_lea.sflag [#allocation6], %s229
        %s231 = sand.u32 %s44, 1
        %s232 = smul.addr %s231, 8
        %s233 = scalar_lea.vmem [#allocation5], %s232
        // Predicated region
        $region29: #{tpu_custom_call.1} parent=27 // pred_check
          %p234 = pneg %p57
        $region30: #{tpu_custom_call.1} parent=27 // pred_check_branch
          %236 = sbr.rel (%p234) target = $region32
        $region31: #{tpu_custom_call.1} parent=27 // pred_region
          %238 = dma.done %s230, 128
        $region32: #{tpu_custom_call.1} parent=27 // pred_fallthru
          _
        %s239 = sand.u32 %s72, 1
        %s240 = scalar_lea.sflag [#allocation8], %s239
        %s241 = sand.u32 %s72, 1
        %s242 = smul.addr %s241, 8
        %s243 = scalar_lea.vmem [#allocation7], %s242
        // Predicated region
        $region33: #{tpu_custom_call.1} parent=27 // pred_check
          %p244 = pneg %p85
        $region34: #{tpu_custom_call.1} parent=27 // pred_check_branch
          %246 = sbr.rel (%p244) target = $region36
        $region35: #{tpu_custom_call.1} parent=27 // pred_region
          %248 = dma.done %s240, 128
        $region36: #{tpu_custom_call.1} parent=27 // pred_fallthru
          _
        %s249 = sand.u32 %s44, 1
        %s250 = scalar_lea.sflag [#allocation6], %s249
        %s251 = sand.u32 %s44, 1
        %s252 = smul.addr %s251, 8
        %s253 = scalar_lea.vmem [#allocation5], %s252
        %p254 = pneg %p57
        %p255 = pneg %p54
        %s256 = sand.u32 %s72, 1
        %s257 = scalar_lea.sflag [#allocation8], %s256
        %s258 = sand.u32 %s72, 1
        %s259 = smul.addr %s258, 8
        %s260 = scalar_lea.vmem [#allocation7], %s259
        %p261 = pneg %p85
        %p262 = pneg %p82
        %p263 = pneg %p111
        %p264 = pneg %p108
        %p265 = scmp.lt.s32.totalorder %s26, 1
        %s266 = scalar_select %p265, %s26, 1
        %s267 = smul.addr %s266, 8
        %s268 = scalar_lea.vmem %s2, %s267
        %p269 = pneg %p137
        %p270 = pneg %p134
        %p271 = scmp.lt.s32.totalorder %s26, 1
        %s272 = scalar_select %p271, %s26, 1
        %s273 = smul.addr %s272, 8
        %s274 = scalar_lea.vmem %s3, %s273
        %p275 = pneg %p163
        %p276 = pneg %p160
        %p277 = scmp.lt.s32.totalorder %s26, 1
        %s278 = scalar_select %p277, %s26, 1
        %s279 = smul.addr %s278, 8
        %s280 = scalar_lea.vmem %s4, %s279
        %p281 = scmp.lt.s32.totalorder %s26, 1
        %s282 = scalar_select %p281, %s26, 1
        %s283 = smul.addr %s282, 8
        %s284 = scalar_lea.vmem %s2, %s283
        %p285 = scmp.lt.s32.totalorder %s26, 1
        %s286 = scalar_select %p285, %s26, 1
        %s287 = smul.addr %s286, 8
        %s288 = scalar_lea.vmem %s3, %s287
        %p289 = scmp.lt.s32.totalorder %s26, 1
        %s290 = scalar_select %p289, %s26, 1
        %s291 = smul.addr %s290, 8
        %s292 = scalar_lea.vmem %s4, %s291
        %p293 = scmp.eq.s32.totalorder %s27, 0
        // Predicated region
        $region37: #{tpu_custom_call.1} parent=27 // pred_check
          %p294 = pneg %p293
        $region38: #{tpu_custom_call.1} parent=27 // pred_check_branch
          %296 = sbr.rel (%p294) target = $region40
        $region39: #{tpu_custom_call.1} parent=27 // pred_region
          %vm297 = vcmask 7168
          %298 = vst.msk [vmem:[#allocation2] sm:$0xff] %vm297, 0.0
          %299 = vst.msk [vmem:[#allocation3] sm:$0xff] %vm297, -inf
          %300 = vst.msk [vmem:[#allocation4] sm:$0xff] %vm297, -inf
        $region40: #{tpu_custom_call.1} parent=27 // pred_fallthru
          _
        %v301 = vld [vmem:[%s233] sm:$0xff]
        %v302 = vld [vmem:[%s243] sm:$0xff]
        %v303 = vsub.f32 %v301, %v302
        %v304 = vmul.f32 %v303, %v303
        %v305 = vld [vmem:[#allocation2] sm:$0xff]
        %306 = vadd.xlane.f32.xlu0 %v304
        %v307 = vpop.xlane.xlu0 %306
        %v308 = vadd.f32 %v305, %v307
        %vm309 = vcmask 7168
        %310 = vst.msk [vmem:[#allocation2] sm:$0xff] %vm309, %v308
        %v311 = vld [vmem:[#allocation3] sm:$0xff]
        %312 = vmax.xlane.f32.xlu0 %v301
        %v313 = vpop.xlane.xlu0 %312
        %v314 = vmax.f32 %v311, %v313
        %315 = vst.msk [vmem:[#allocation3] sm:$0xff] %vm309, %v314
        %v316 = vld [vmem:[#allocation4] sm:$0xff]
        %317 = vmax.xlane.f32.xlu0 %v302
        %v318 = vpop.xlane.xlu0 %317
        %v319 = vmax.f32 %v316, %v318
        %320 = vst.msk [vmem:[#allocation4] sm:$0xff] %vm309, %v319
        // Predicated region
        $region41: #{tpu_custom_call.1} parent=27 // pred_check
          %p321 = pneg %p293
        $region42: #{tpu_custom_call.1} parent=27 // pred_check_branch
          %323 = sbr.rel (%p321) target = $region44
        $region43: #{tpu_custom_call.1} parent=27 // pred_region
          %v324 = vld [vmem:[#allocation2] sm:$0xff]
          %325 = vst.msk [vmem:[%s284] sm:$0xff] %vm309, %v324
          %v326 = vld [vmem:[#allocation3] sm:$0xff]
          %327 = vst.msk [vmem:[%s288] sm:$0xff] %vm309, %v326
          %v328 = vld [vmem:[#allocation4] sm:$0xff]
          %329 = vst.msk [vmem:[%s292] sm:$0xff] %vm309, %v328
        $region44: #{tpu_custom_call.1} parent=27 // pred_fallthru
          _
        %p330 = scmp.lt.s32.totalorder %s26, 1
        %s331 = scalar_select %p330, %s26, 1
        %s332 = smul.addr %s331, 8
        %s333 = scalar_lea.vmem %s2, %s332
        %p334 = scmp.lt.s32.totalorder %s26, 1
        %s335 = scalar_select %p334, %s26, 1
        %s336 = smul.addr %s335, 8
        %s337 = scalar_lea.vmem %s3, %s336
        %p338 = scmp.lt.s32.totalorder %s26, 1
        %s339 = scalar_select %p338, %s26, 1
        %s340 = smul.addr %s339, 8
        %s341 = scalar_lea.vmem %s4, %s340
        // Predicated region
        $region45: #{tpu_custom_call.1} parent=27 // pred_check
          %p342 = pneg %p108
        $region46: #{tpu_custom_call.1} parent=27 // pred_check_branch
          %344 = sbr.rel (%p342) target = $region48
        $region47: #{tpu_custom_call.1} parent=27 // pred_region
          _
        $region48: #{tpu_custom_call.1} parent=27 // pred_fallthru
          _
        // Predicated region
        $region49: #{tpu_custom_call.1} parent=27 // pred_check
          %p345 = pneg %p134
        $region50: #{tpu_custom_call.1} parent=27 // pred_check_branch
          %347 = sbr.rel (%p345) target = $region52
        $region51: #{tpu_custom_call.1} parent=27 // pred_region
          _
        $region52: #{tpu_custom_call.1} parent=27 // pred_fallthru
          _
        // Predicated region
        $region53: #{tpu_custom_call.1} parent=27 // pred_check
          %p348 = pneg %p160
        $region54: #{tpu_custom_call.1} parent=27 // pred_check_branch
          %350 = sbr.rel (%p348) target = $region56
        $region55: #{tpu_custom_call.1} parent=27 // pred_region
          _
        $region56: #{tpu_custom_call.1} parent=27 // pred_fallthru
          _
      $region28: #{tpu_custom_call.1} parent=5 // pred_fallthru
        _
      %p351 = scmp.le.s32.totalorder 2, %s17
      // Predicated region
      $region57: #{tpu_custom_call.1} parent=5 // pred_check
        %p352 = pneg %p351
      $region58: #{tpu_custom_call.1} parent=5 // pred_check_branch
        %354 = sbr.rel (%p352) target = $region60
      $region59: #{tpu_custom_call.1} parent=5 // pred_region
        %s355 = ssub.s32 %s17, 2
        // Predicated region
        $region61: #{tpu_custom_call.1} parent=59 // pred_check
          %p356 = pneg %p114
        $region62: #{tpu_custom_call.1} parent=59 // pred_check_branch
          %358 = sbr.rel (%p356) target = $region64
        $region63: #{tpu_custom_call.1} parent=59 // pred_region
          %p359 = scmp.lt.s32.totalorder %s28, 1
          %s360 = scalar_select %p359, %s28, 1
          %s361 = smul.addr %s360, 8
          %s362 = scalar_lea.vmem %s2, %s361
        $region64: #{tpu_custom_call.1} parent=59 // pred_fallthru
          _
        // Predicated region
        $region65: #{tpu_custom_call.1} parent=59 // pred_check
          %p363 = pneg %p140
        $region66: #{tpu_custom_call.1} parent=59 // pred_check_branch
          %365 = sbr.rel (%p363) target = $region68
        $region67: #{tpu_custom_call.1} parent=59 // pred_region
          %p366 = scmp.lt.s32.totalorder %s28, 1
          %s367 = scalar_select %p366, %s28, 1
          %s368 = smul.addr %s367, 8
          %s369 = scalar_lea.vmem %s3, %s368
        $region68: #{tpu_custom_call.1} parent=59 // pred_fallthru
          _
        // Predicated region
        $region69: #{tpu_custom_call.1} parent=59 // pred_check
          %p370 = pneg %p166
        $region70: #{tpu_custom_call.1} parent=59 // pred_check_branch
          %372 = sbr.rel (%p370) target = $region72
        $region71: #{tpu_custom_call.1} parent=59 // pred_region
          %p373 = scmp.lt.s32.totalorder %s28, 1
          %s374 = scalar_select %p373, %s28, 1
          %s375 = smul.addr %s374, 8
          %s376 = scalar_lea.vmem %s4, %s375
        $region72: #{tpu_custom_call.1} parent=59 // pred_fallthru
          _
      $region60: #{tpu_custom_call.1} parent=5 // pred_fallthru
        _
    $region6: #{tpu_custom_call.1} parent=1 // loop_footer
      %s21 = sadd.s32 1, %s17
    $region7: #{tpu_custom_call.1} parent=1 // loop_footer_branch
      %16 = sbr.rel target = $region3
    $region8: #{tpu_custom_call.1} parent=1 // loop_exit
      _
    %377 = vsyncpa [#allocation6], 1
    %s378 = scalar_lea.sflag [#allocation6], 1
    %379 = vsyncpa %s378, 1
    %380 = vsyncpa [#allocation8], 1
    %s381 = scalar_lea.sflag [#allocation8], 1
    %382 = vsyncpa %s381, 1

</llo_original>
